<compile_context>
chip_gen: v7x
topology: tpu7x:2x2x1
jax: 0.10.0
libtpu: 0.0.40
codegen_flags: <defaults>
</compile_context>

<pallas_src>
import functools

import jax
import jax.numpy as jnp
from jax.experimental import pallas as pl
from jax.experimental.pallas import tpu as pltpu


# ----------------------------------------------------------------------------
# Buffer construction (matches the torch module's __init__ exactly; setup glue).
# ----------------------------------------------------------------------------
def make_positional_encoding(d_model: int, max_len: int = 60, dtype=jnp.float32):
    # NOTE: this mirrors the source module, which interleaves sin/cos along the
    # *sequence* axis (rows 0::2 / 1::2) with div_term built from
    # arange(0, max_len, 2) / d_model — intentionally kept identical.
    assert max_len % 2 == 0, "module's construction requires an even max_len"
    position = jnp.arange(max_len // 2, dtype=dtype)[:, None]               # (max_len//2, 1)
    div_term = jnp.exp(
        jnp.arange(0, max_len, 2, dtype=dtype)
        * (-jnp.log(jnp.asarray(10000.0, dtype)) / d_model)
    )                                                                        # (max_len//2,)
    div_term = jnp.broadcast_to(div_term[:, None], (max_len // 2, d_model))  # (max_len//2, D)
    pe = jnp.zeros((max_len, d_model), dtype)
    pe = pe.at[0::2, :].set(jnp.sin(position * div_term))
    pe = pe.at[1::2, :].set(jnp.cos(position * div_term))
    return pe                                                                # (max_len, D)


# ----------------------------------------------------------------------------
# Kernels (operate on lane-dense 2-D tiles)
# ----------------------------------------------------------------------------
def _pe_add_kernel(x_ref, pe_ref, o_ref):
    # x_ref: (tr, tc) rows of the flattened (B, S*D) input; pe_ref: (1, tc).
    o_ref[...] = (x_ref[...] + pe_ref[...]).astype(o_ref.dtype)


def _pe_add_dropout_kernel(x_ref, pe_ref, bits_ref, o_ref, *, threshold, scale):
    # Inverted dropout: keep iff uint32 bits >= round(p * 2^32); one select, one mul.
    y = x_ref[...] + pe_ref[...]
    keep = bits_ref[...] >= jnp.uint32(threshold)
    o_ref[...] = jnp.where(keep, y * jnp.asarray(scale, y.dtype), jnp.zeros_like(y)).astype(
        o_ref.dtype
    )


# ----------------------------------------------------------------------------
# Tiling helper: ~1 MiB per block, keeps every chip's scoped-VMEM budget safe.
# ----------------------------------------------------------------------------
def _pick_tiles(n_rows, n_cols, itemsize, budget_bytes=1 << 20):
    max_elems = max(1, budget_bytes // itemsize)
    if n_cols <= max_elems:
        tc = n_cols                                   # full row -> any width legal
    else:
        tc = max(128, (max_elems // 8) // 128 * 128)  # multiple of 128, room for 8 sublanes
        tc = min(tc, n_cols)
    rows_fit = max(1, max_elems // tc)
    if rows_fit >= n_rows:
        tr = n_rows                                   # full batch -> any height legal
    else:
        tr = min(max(8, (rows_fit // 8) * 8), n_rows) # multiple of 8
    return tr, tc


# ----------------------------------------------------------------------------
# Wrapper
# ----------------------------------------------------------------------------
def positional_encoding_forward(x, pe, *, p: float = 0.1, training: bool = False, rng_key=None):
    """x: (B, S, D); pe: (max_len, D). Returns dropout(x + pe[:S]) with forward
    semantics identical to the PyTorch module."""
    B, S, D = x.shape
    assert S <= pe.shape[0], "seq_len exceeds positional-encoding buffer (max_len)"
    assert 0.0 <= p < 1.0

    L = S * D
    x2 = x.reshape(B, L)                               # lane-dense flattened view
    pe_row = pe[:S].astype(x.dtype).reshape(1, L)      # keep the add in x's dtype

    tr, tc = _pick_tiles(B, L, jnp.dtype(x.dtype).itemsize)
    grid = (pl.cdiv(B, tr), pl.cdiv(L, tc))

    x_spec = pl.BlockSpec((tr, tc), lambda i, j: (i, j))
    pe_spec = pl.BlockSpec((1, tc), lambda i, j: (0, j))
    out_spec = pl.BlockSpec((tr, tc), lambda i, j: (i, j))
    cparams = pltpu.CompilerParams(dimension_semantics=("parallel", "parallel"))

    if not training or p == 0.0:
        out2 = pl.pallas_call(
            _pe_add_kernel,
            out_shape=jax.ShapeDtypeStruct((B, L), x.dtype),
            grid=grid,
            in_specs=[x_spec, pe_spec],
            out_specs=out_spec,
            compiler_params=cparams,
        )(x2, pe_row)
        return out2.reshape(B, S, D)

    if rng_key is None:
        rng_key = jax.random.PRNGKey(0)
    # Mask bits generated host-side (portable: no TPU-only PRNG primitives).
    bits = jax.random.bits(rng_key, (B, L), dtype=jnp.uint32)
    threshold = min(int(round(p * 2.0**32)), 2**32 - 1)
    kernel = functools.partial(
        _pe_add_dropout_kernel, threshold=threshold, scale=1.0 / (1.0 - p)
    )
    out2 = pl.pallas_call(
        kernel,
        out_shape=jax.ShapeDtypeStruct((B, L), x.dtype),
        grid=grid,
        in_specs=[x_spec, pe_spec, x_spec],   # bits tiled exactly like x
        out_specs=out_spec,
        compiler_params=cparams,
    )(x2, pe_row, bits)
    return out2.reshape(B, S, D)


# ----------------------------------------------------------------------------
# Demo / self-test
# ----------------------------------------------------------------------------
if __name__ == "__main__":
    B, S, D = 2, 8, 32
    MAX_LEN = 60
    P_DROP = 0.1

    key = jax.random.PRNGKey(0)
    x_key, drop_key = jax.random.split(key)
    x = jax.random.normal(x_key, (B, S, D), dtype=jnp.float32)
    pe = make_positional_encoding(D, max_len=MAX_LEN)

    ref = x + pe[:S][None, :, :]

    # Eval mode (dropout == identity): must match the reference exactly.
    out_eval = jax.block_until_ready(
        positional_encoding_forward(x, pe, p=P_DROP, training=False)
    )
    assert out_eval.shape == (B, S, D)
    assert jnp.allclose(out_eval, ref, atol=1e-6, rtol=1e-6), "eval-mode mismatch"

    # Training mode (inverted dropout): mask is deterministic given drop_key, so
    # we can check the kernel against an exact pure-JAX reference.
    out_train = jax.block_until_ready(
        positional_encoding_forward(x, pe, p=P_DROP, training=True, rng_key=drop_key)
    )
    assert out_train.shape == (B, S, D)
    threshold = min(int(round(P_DROP * 2.0**32)), 2**32 - 1)
    bits = jax.random.bits(drop_key, (B, S * D), dtype=jnp.uint32).reshape(B, S, D)
    expected = jnp.where(
        bits >= jnp.uint32(threshold), ref * jnp.float32(1.0 / (1.0 - P_DROP)), 0.0
    )
    assert jnp.allclose(out_train, expected, atol=1e-6, rtol=1e-6), "train-mode mismatch"

    print("KERNEL_OK")
</pallas_src>

<mosaic_0001>
module attributes {stable_mosaic.version = 11 : i64} {
  func.func @_pe_add_kernel(%arg0: i32, %arg1: i32, %arg2: memref<2x256xf32, #tpu.memory_space<vmem>>, %arg3: memref<1x256xf32, #tpu.memory_space<vmem>>, %arg4: memref<2x256xf32, #tpu.memory_space<vmem>>) attributes {dimension_semantics = [#tpu.dimension_semantics<parallel>, #tpu.dimension_semantics<parallel>], iteration_bounds = array<i64: 1, 1>, scalar_prefetch = 0 : i64, scratch_operands = 0 : i64, tpu.core_type = #tpu.core_type<tc>, window_params = [{transform_indices = @transform_0, window_bounds = array<i64: 2, 256>}, {transform_indices = @transform_1, window_bounds = array<i64: 1, 256>}, {transform_indices = @transform_2, window_bounds = array<i64: 2, 256>}]} {
    %c0 = arith.constant 0 : index
    %c0_0 = arith.constant 0 : index
    %0 = vector.load %arg2[%c0, %c0_0] : memref<2x256xf32, #tpu.memory_space<vmem>>, vector<2x256xf32>
    %c0_1 = arith.constant 0 : index
    %c0_2 = arith.constant 0 : index
    %1 = vector.load %arg3[%c0_1, %c0_2] : memref<1x256xf32, #tpu.memory_space<vmem>>, vector<1x256xf32>
    %2 = vector.broadcast %1 : vector<1x256xf32> to vector<2x256xf32>
    %3 = arith.addf %0, %2 : vector<2x256xf32>
    %c0_3 = arith.constant 0 : index
    %c0_4 = arith.constant 0 : index
    %4 = vector.load %arg4[%c0_3, %c0_4] : memref<2x256xf32, #tpu.memory_space<vmem>>, vector<2x256xf32>
    tpu.vector_store %arg4[%c0_3, %c0_4], %3 {strides = array<i32>} : memref<2x256xf32, #tpu.memory_space<vmem>>, vector<2x256xf32>,
    return
  }
  func.func @transform_0(%arg0: i32, %arg1: i32) -> (i32, i32) {
    %c0_i32 = arith.constant 0 : i32
    return %arg0, %arg1 : i32, i32
  }
  func.func @transform_1(%arg0: i32, %arg1: i32) -> (i32, i32) {
    %c0_i32 = arith.constant 0 : i32
    %c0_i32_0 = arith.constant 0 : i32
    return %c0_i32, %arg1 : i32, i32
  }
  func.func @transform_2(%arg0: i32, %arg1: i32) -> (i32, i32) {
    %c0_i32 = arith.constant 0 : i32
    return %arg0, %arg1 : i32, i32
  }
}

</mosaic_0001>

<llo_original>
// kernel: tpu_custom_call.1
$region0: #{tpu_custom_call.1}
  #allocation0 [shape = 'u32[]', space=smem, size = 0x4, offset = 0x4, fixed_abs, tag = 'smem constant byte address 0x4 - core index']
  #allocation1 [shape = 'u32[144,128]{1,0:T(1,128)}', space=vmem, size = 0x12000, scoped, tag = 'internal scratch']
  %s0 = inlined_call_operand.hbm [shape: f32[2,256], index: 0, kind: input, shape index: {}]
  %s1 = inlined_call_operand.vmem [shape: f32[1,256], index: 1, kind: input, shape index: {}]
  %s2 = inlined_call_operand.hbm [shape: f32[2,256], index: 2, kind: output, shape index: {}]
  %s3 = sld [smem:[#allocation0]]
  $region22: #{tpu_custom_call.1} parent=0
    _
  %s5 = ssub.s32 1, %s3
  %s6 = scalar_select 0, %s5, %s3
  $region1: #{tpu_custom_call.1} parent=0
    #allocation2 [shape = 'u8[2048]{0}', space=vmem, size = 0x800, scoped, tag = 'input window, operand 0, single buffered']
    #allocation3 [shape = 's32[1]{0}', space=sflag, size = 0x4, scoped, tag = 'scoped memory for tpu_custom_call.1']
    #allocation4 [shape = 's32[1]{0}', space=sflag, size = 0x4, scoped, tag = 'scoped memory for tpu_custom_call.1']
    #allocation5 [shape = 'u8[2048]{0}', space=vmem, size = 0x800, scoped, tag = 'output window, operand 0, single buffered']
    %7 = vsyncpa [#allocation3], 0
    %8 = vsyncpa [#allocation4], 0
    // Predicated region
    $region2: #{tpu_custom_call.1} parent=1 // pred_check
      _
    $region3: #{tpu_custom_call.1} parent=1 // pred_check_branch
      %10 = sbr.rel (0) target = $region5
    $region4: #{tpu_custom_call.1} parent=1 // pred_region
      %s12 = ssub.s32 64, 64
      %13 = vsyncadd [#allocation3], %s12
      %s15 = sshll.u32 [#allocation2], 4
      %s16 = int_to_ptr.vmem [resolvable:$true] %s15
      %18 = dma.hbm_to_vmem [thread:$0]  %s0, 64, %s16, [#allocation3]
    $region5: #{tpu_custom_call.1} parent=1 // pred_fallthru
      _
    // Predicated region
    $region6: #{tpu_custom_call.1} parent=1 // pred_check
      _
    $region7: #{tpu_custom_call.1} parent=1 // pred_check_branch
      %20 = sbr.rel (0) target = $region9
    $region8: #{tpu_custom_call.1} parent=1 // pred_region
      _
    $region9: #{tpu_custom_call.1} parent=1 // pred_fallthru
      _
    // Predicated region
    $region10: #{tpu_custom_call.1} parent=1 // pred_check
      _
    $region11: #{tpu_custom_call.1} parent=1 // pred_check_branch
      %22 = sbr.rel (0) target = $region13
    $region12: #{tpu_custom_call.1} parent=1 // pred_region
      %23 = dma.done [#allocation3], 64
    $region13: #{tpu_custom_call.1} parent=1 // pred_fallthru
      _
    %v24 = vld [vmem:[#allocation2] sm:$0xf]
    %v25 = vld [vmem:[%s1] sm:$0x3]
    %v27 = vlaneseq
    %v28 = vshrl.u32 %v27, 7
    %v29 = vsub.s32 0, %v28
    %v30 = vrot.slane %v25, %v29
    %v31 = vlaneseq
    %v32 = vshrl.u32 %v31, 7
    %v33 = vsub.s32 1, %v32
    %v34 = vrot.slane %v25, %v33
    %v35 = vcombine.low %v30, %v34
    %v37 = vunpack.c.l.s4 1983009808
    %v38 = vunpack.c.0.s8 %v37
    %v39 = vlaneseq
    %v40 = vshrl.u32 %v39, 7
    %v41 = vsub.s32 %v38, %v40
    %v42 = vrot.slane %v35, %v41
    %v44 = vadd.f32 %v24, %v42
    %45 = vst [vmem:[#allocation5] sm:$0xf] %v44
    // Predicated region
    $region14: #{tpu_custom_call.1} parent=1 // pred_check
      _
    $region15: #{tpu_custom_call.1} parent=1 // pred_check_branch
      %47 = sbr.rel (0) target = $region17
    $region16: #{tpu_custom_call.1} parent=1 // pred_region
      %s49 = ssub.s32 64, 64
      %50 = vsyncadd [#allocation4], %s49
      %s52 = sshll.u32 [#allocation5], 4
      %s53 = int_to_ptr.vmem [resolvable:$true] %s52
      %55 = dma.vmem_to_hbm [thread:$0]  %s53, 64, %s2, [#allocation4]
    $region17: #{tpu_custom_call.1} parent=1 // pred_fallthru
      _
    // Predicated region
    $region18: #{tpu_custom_call.1} parent=1 // pred_check
      _
    $region19: #{tpu_custom_call.1} parent=1 // pred_check_branch
      %57 = sbr.rel (0) target = $region21
    $region20: #{tpu_custom_call.1} parent=1 // pred_region
      %58 = dma.done [#allocation4], 64
    $region21: #{tpu_custom_call.1} parent=1 // pred_fallthru
      _
    %59 = vsyncpa [#allocation3], 1
    %60 = vsyncpa [#allocation4], 1

</llo_original>
